<compile_context>
chip_gen: v6e
topology: v6e:2x2x1
jax: 0.10.0
libtpu: 0.0.40
codegen_flags: <defaults>
</compile_context>

<pallas_src>
import jax
import jax.numpy as jnp
from jax.experimental import pallas as pl
from jax.experimental.pallas import tpu as pltpu


# ---------------------------------------------------------------------------
# Kernel body
# ---------------------------------------------------------------------------
def _vnlinear_kernel(w_ref, x_ref, o_ref):
    # w_ref: (TC, C_in)   x_ref: (TB, C_in, TM)   o_ref: (TB, TC, TM)
    w = w_ref[...]
    for bi in range(x_ref.shape[0]):  # TB is small & static -> fully unrolled
        o_ref[bi] = jnp.dot(
            w,
            x_ref[bi],
            preferred_element_type=jnp.float32,
            precision=jax.lax.Precision.HIGHEST,
        ).astype(o_ref.dtype)


# ---------------------------------------------------------------------------
# Sizing helpers
# ---------------------------------------------------------------------------
_STEP_BYTES_TARGET = 2 * 1024 * 1024  # ~2 MiB of streamed x+out per grid step


def _round_up(v, m):
    return ((int(v) + m - 1) // m) * m


def _round_down(v, m):
    return (int(v) // m) * m


def _sublane(itemsize):
    # Physical sublane packing multiple: f32 -> 8, bf16 -> 16, int8/fp8 -> 32.
    return max(8, 32 // int(itemsize))


def _vmem_capacity_bytes():
    try:
        return int(pltpu.get_tpu_info().vmem_capacity_bytes)
    except Exception:
        # Conservative fallback (v7x per-TC VMEM) -- safe on every generation.
        return 64 * 1024 * 1024


def _make_spec(shape, index_map, buffers=None):
    """BlockSpec with optional pipeline depth; plain spec if unsupported."""
    if buffers is not None and hasattr(pl, "Buffered"):
        try:
            return pl.BlockSpec(shape, index_map, pipeline_mode=pl.Buffered(buffers))
        except TypeError:  # older BlockSpec signature without pipeline_mode
            pass
    return pl.BlockSpec(shape, index_map)


def _snap_user_tm(tm_req, m):
    """Snap a user TM to a 128-multiple divisor of M (avoids masked tails)."""
    if m <= 128 or tm_req >= m:
        return m
    d = _round_down(min(tm_req, m), 128)
    while d >= 128:
        if m % d == 0:
            return d
        d -= 128
    return max(128, _round_down(tm_req, 128))


def _pick_tiles(b, c_in, c_out, m, itemsize, capacity, tm_user=None):
    """Choose (TB, TC, TM) + padded channel sizes under a per-gen VMEM budget."""
    sub = _sublane(itemsize)
    c_in_pad = _round_up(c_in, sub)

    # --- C_out tile: only split very large channel counts -------------------
    tc = c_out
    if c_out >= 512:
        for cand in (256, 128):
            if c_out % cand == 0:
                tc = cand
                break
    tc_pad = _round_up(tc, sub)

    # --- Generation-aware VMEM budget (physical, padded, sizes) -------------
    w_phys = tc_pad * _round_up(c_in, 128) * itemsize
    budget = max(int(0.40 * capacity) - 2 * w_phys, 4 * 1024 * 1024)

    per_lane_stream = (c_in_pad + tc_pad) * itemsize            # x+out, 1 buffer
    per_lane_buffered = (3 * c_in_pad + 2 * tc_pad) * itemsize  # worst-case bufs

    # --- Lane tile TM: hit the per-step byte target, bounded by VMEM --------
    if tm_user is not None:
        tm = _snap_user_tm(int(tm_user), m)
    else:
        tm_target = _round_up(max(128, _STEP_BYTES_TARGET // per_lane_stream), 128)
        tm_cap = max(128, _round_down(budget // per_lane_buffered, 128))
        tm = min(tm_target, tm_cap)
        if tm >= m:
            tm = m
        else:
            # Even out lane blocks so there is no tiny masked tail block.
            n_m = pl.cdiv(m, tm)
            tm = min(m, _round_up(pl.cdiv(m, n_m), 128))

    # --- Batch tile TB: grow only when one batch fits in a single lane tile --
    tb = 1
    if tm >= m and b > 1:
        step_bytes = max(1, per_lane_stream * m)
        want = max(1, -(-_STEP_BYTES_TARGET // step_bytes))
        tb_cap = max(1, budget // max(1, per_lane_buffered * m))
        tb = int(min(b, want, tb_cap))
        while tb > 1 and b % tb != 0:  # keep batch blocks full (no masked tail)
            tb -= 1

    # --- Guarantee >= 2 grid points so the v7x megacore (2 TCs) gets work ----
    n_pts = pl.cdiv(b, tb) * pl.cdiv(c_out, tc) * pl.cdiv(m, tm)
    if n_pts < 2:
        if b > 1:
            tb = (b + 1) // 2
        elif m >= 256:
            tm = _round_up(-(-m // 2), 128)
        elif c_out >= 2 * sub:
            tc = _round_up(-(-c_out // 2), sub)
            tc_pad = _round_up(tc, sub)

    return tb, tc, tm, c_in_pad, tc_pad


# ---------------------------------------------------------------------------
# pallas_call wrapper
# ---------------------------------------------------------------------------
def _vn_linear_3d(x3d, w, *, tm=None):
    """x3d: [B, C_in, M], w: [C_out, C_in] -> [B, C_out, M]."""
    b, c_in, m = x3d.shape
    c_out = w.shape[0]
    itemsize = max(jnp.dtype(x3d.dtype).itemsize, jnp.dtype(w.dtype).itemsize)
    capacity = _vmem_capacity_bytes()

    tb, tc, tm_eff, c_in_pad, tc_pad = _pick_tiles(
        b, c_in, c_out, m, itemsize, capacity, tm_user=tm)

    n_b = pl.cdiv(b, tb)
    n_co = pl.cdiv(c_out, tc)
    n_m = pl.cdiv(m, tm_eff)
    n_steps = n_b * n_co * n_m

    # Physical (sublane/lane padded) tile footprints -> right-sized VMEM limit.
    x_tile = tb * c_in_pad * tm_eff * itemsize
    o_tile = tb * tc_pad * tm_eff * itemsize
    w_tile = tc_pad * _round_up(c_in, 128) * itemsize

    # Drop the unused 2nd weight buffer only when the weight is actually large;
    # triple-buffer the x stream only when per-step tiles are small and there
    # are enough steps for the extra depth to hide DMA latency.
    w_bufs = 1 if w_tile > (512 << 10) else None
    x_bufs = 3 if (x_tile < (1 << 20) and n_steps > 2) else None

    need = 2 * w_tile + max(x_bufs or 2, 2) * x_tile + 2 * o_tile
    vmem_limit = int(min(0.9 * capacity, max(2 * need + (8 << 20), 32 << 20)))

    cost = pl.CostEstimate(
        flops=2 * b * c_out * c_in * m,
        transcendentals=0,
        bytes_accessed=(b * c_in * m + b * c_out * m + c_out * c_in) * itemsize,
    )

    return pl.pallas_call(
        _vnlinear_kernel,
        out_shape=jax.ShapeDtypeStruct((b, c_out, m), x3d.dtype),
        grid_spec=pltpu.PrefetchScalarGridSpec(
            num_scalar_prefetch=0,
            grid=(n_b, n_co, n_m),
            in_specs=[
                # Weight: constant block index along b/m -> stays VMEM resident.
                _make_spec((tc, c_in), lambda bi, co, mi: (co, 0), buffers=w_bufs),
                # Streaming x slab (batch-tiled so per-step bytes hit the target).
                _make_spec((tb, c_in, tm_eff), lambda bi, co, mi: (bi, 0, mi),
                           buffers=x_bufs),
            ],
            out_specs=_make_spec((tb, tc, tm_eff), lambda bi, co, mi: (bi, co, mi)),
        ),
        compiler_params=pltpu.CompilerParams(
            # C_in is contracted whole within each step -> no carried reduction,
            # every grid axis is parallel (megacore-shardable on v7x).
            dimension_semantics=("parallel", "parallel", "parallel"),
            vmem_limit_bytes=vmem_limit,
        ),
        cost_estimate=cost,
    )(w, x3d)


def vn_linear(x, w, *, tm=None):
    """x: [B, C_in, 3, N, ...] (any trailing dims), w: [C_out, C_in]."""
    B, C_in = x.shape[0], x.shape[1]
    trailing = x.shape[2:]
    M = 1
    for s in trailing:
        M *= s
    C_out = w.shape[0]
    out = _vn_linear_3d(x.reshape(B, C_in, M), w, tm=tm)  # (B, C_out, M)
    return out.reshape((B, C_out) + trailing)


if __name__ == "__main__":
    key = jax.random.PRNGKey(0)
    kx, kw, kx2, kw2 = jax.random.split(key, 4)

    # --- Small shapes matching the module docstring: [B, C_in, 3, N] --------
    B, C_in, C_out, N = 2, 4, 8, 16
    x = jax.random.normal(kx, (B, C_in, 3, N), dtype=jnp.float32)
    bound = 1.0 / (C_in ** 0.5)  # nn.Linear default init range (bias=False)
    w = jax.random.uniform(kw, (C_out, C_in), dtype=jnp.float32,
                           minval=-bound, maxval=bound)

    out = jax.block_until_ready(vn_linear(x, w))
    ref = jnp.einsum("oi,bidn->bodn", w, x,
                     precision=jax.lax.Precision.HIGHEST)
    assert out.shape == (B, C_out, 3, N)
    assert jnp.allclose(out, ref, atol=1e-5, rtol=1e-5)

    # --- Larger shapes: exercises the lane-dense streaming path -------------
    B2, C_in2, C_out2, N2 = 2, 8, 16, 512  # M = 3*512 = 1536
    x2 = jax.random.normal(kx2, (B2, C_in2, 3, N2), dtype=jnp.float32)
    bound2 = 1.0 / (C_in2 ** 0.5)
    w2 = jax.random.uniform(kw2, (C_out2, C_in2), dtype=jnp.float32,
                            minval=-bound2, maxval=bound2)

    out2 = jax.block_until_ready(vn_linear(x2, w2))
    ref2 = jnp.einsum("oi,bidn->bodn", w2, x2,
                      precision=jax.lax.Precision.HIGHEST)
    assert out2.shape == (B2, C_out2, 3, N2)
    assert jnp.allclose(out2, ref2, atol=1e-4, rtol=1e-4)

    print("KERNEL_OK")
</pallas_src>

<mosaic_0001>
module attributes {stable_mosaic.version = 11 : i64} {
  func.func @_vnlinear_kernel(%arg0: i32, %arg1: i32, %arg2: i32, %arg3: memref<8x4xf32, #tpu.memory_space<vmem>>, %arg4: memref<1x4x48xf32, #tpu.memory_space<vmem>>, %arg5: memref<1x8x48xf32, #tpu.memory_space<vmem>>) attributes {dimension_semantics = [#tpu.dimension_semantics<parallel>, #tpu.dimension_semantics<parallel>, #tpu.dimension_semantics<parallel>], iteration_bounds = array<i64: 2, 1, 1>, scalar_prefetch = 0 : i64, scratch_operands = 0 : i64, tpu.core_type = #tpu.core_type<tc>, window_params = [{transform_indices = @transform_0, window_bounds = array<i64: 8, 4>}, {transform_indices = @transform_1, window_bounds = array<i64: 1, 4, 48>}, {transform_indices = @transform_2, window_bounds = array<i64: 1, 8, 48>}]} {
    %c0 = arith.constant 0 : index
    %c0_0 = arith.constant 0 : index
    %0 = vector.load %arg3[%c0, %c0_0] : memref<8x4xf32, #tpu.memory_space<vmem>>, vector<8x4xf32>
    %c0_1 = arith.constant 0 : index
    %c0_2 = arith.constant 0 : index
    %c0_3 = arith.constant 0 : index
    %1 = vector.load %arg4[%c0_1, %c0_2, %c0_3] : memref<1x4x48xf32, #tpu.memory_space<vmem>>, vector<1x4x48xf32>
    %2 = vector.shape_cast %1 : vector<1x4x48xf32> to vector<4x48xf32>
    %cst = arith.constant dense<0.000000e+00> : vector<8x48xf32>
    %3 = tpu.matmul %0, %2, %cst {dimension_numbers = #tpu.dot_dimension_numbers<[1], [0], [0], [1], [0, 0, 1, 1], [], []>, precision = #tpu.contract_precision<fp32>} : vector<8x4xf32>, vector<4x48xf32>, vector<8x48xf32> -> vector<8x48xf32>
    %c0_4 = arith.constant 0 : index
    %c0_5 = arith.constant 0 : index
    %c0_6 = arith.constant 0 : index
    %4 = vector.load %arg5[%c0_4, %c0_5, %c0_6] : memref<1x8x48xf32, #tpu.memory_space<vmem>>, vector<1x8x48xf32>
    %5 = vector.shape_cast %4 : vector<1x8x48xf32> to vector<8x48xf32>
    %6 = vector.shape_cast %3 : vector<8x48xf32> to vector<1x8x48xf32>
    tpu.vector_store %arg5[%c0_4, %c0_5, %c0_6], %6 {strides = array<i32>} : memref<1x8x48xf32, #tpu.memory_space<vmem>>, vector<1x8x48xf32>,
    return
  }
  func.func @transform_0(%arg0: i32, %arg1: i32, %arg2: i32) -> (i32, i32) {
    %c0_i32 = arith.constant 0 : i32
    %c0_i32_0 = arith.constant 0 : i32
    return %arg1, %c0_i32 : i32, i32
  }
  func.func @transform_1(%arg0: i32, %arg1: i32, %arg2: i32) -> (i32, i32, i32) {
    %c0_i32 = arith.constant 0 : i32
    %c0_i32_0 = arith.constant 0 : i32
    return %arg0, %c0_i32, %arg2 : i32, i32, i32
  }
  func.func @transform_2(%arg0: i32, %arg1: i32, %arg2: i32) -> (i32, i32, i32) {
    %c0_i32 = arith.constant 0 : i32
    return %arg0, %arg1, %arg2 : i32, i32, i32
  }
}

</mosaic_0001>

<llo_original>
// kernel: tpu_custom_call.1
$region0: #{tpu_custom_call.1}
  #allocation0 [shape = 'u32[]', space=smem, size = 0x4, offset = 0x4, fixed_abs, tag = 'smem constant byte address 0x4 - core index']
  #allocation1 [shape = 'u32[144,128]{1,0:T(1,128)}', space=vmem, size = 0x12000, scoped, tag = 'internal scratch']
  %s0 = inlined_call_operand.vmem [shape: f32[8,4], index: 0, kind: input, shape index: {}]
  %s1 = inlined_call_operand.vmem [shape: f32[2,4,48], index: 1, kind: input, shape index: {}]
  %s2 = inlined_call_operand.hbm [shape: f32[2,8,48], index: 2, kind: output, shape index: {}]
  %s3 = sld [smem:[#allocation0]]
  $region41: #{tpu_custom_call.1} parent=0
    _
  %s5 = ssub.s32 1, %s3
  %s6 = scalar_select 0, %s5, %s3
  $region1: #{tpu_custom_call.1} parent=0
    #allocation2 [shape = 'u8[8192]{0}', space=vmem, size = 0x2000, scoped, tag = 'output window, operand 0']
    #allocation3 [shape = 's32[2]{0}', space=sflag, size = 0x8, scoped, tag = 'scoped memory for tpu_custom_call.1']
    %7 = vsyncpa [#allocation3], 0
    %s8 = scalar_lea.sflag [#allocation3], 1
    %9 = vsyncpa %s8, 0
    loop: start=0, step=1, limit=4
    $region2: #{tpu_custom_call.1} parent=1 // loop_pre_header
      _
    $region3: #{tpu_custom_call.1} parent=1 // loop_header
      %s11 = sphi 0, %s15
      %p12 = scmp.ge.s32.totalorder %s11, 4
      %s18 = sphi 0, %s37
      %s19 = sphi 0, %s33
      %s20 = sphi 0, %s29
      %s21 = sphi 0, %s18
      %s22 = sphi 0, %s19
      %s23 = sphi 0, %s20
      %s24 = sphi 0, %s21
      %s25 = sphi 0, %s22
      %s26 = sphi 0, %s23
      %s40 = sphi 0, %s42
      %s43 = sphi 0, %s40
      %s44 = sphi 0, %s43
      %s60 = sphi 0, %s44
      %s68 = sphi 0, %s70
      %s71 = sphi 0, %s68
      %s72 = sphi 0, %s71
      %s88 = sphi 0, %s72
      %s98 = sphi 0, %s100
      %s101 = sphi 0, %s98
      %s102 = sphi 0, %s101
      %s118 = sphi 0, %s102
    $region4: #{tpu_custom_call.1} parent=1 // loop_header_branch
      %14 = sbr.rel (%p12) target = $region8
    $region5: #{tpu_custom_call.1} parent=1 // loop_body
      %s16 = ssub.s32 %s11, 1
      %s17 = ssub.s32 %s11, 2
      %s27 = sadd.s32 1, %s20
      %p28 = scmp.ge.s32.totalorder %s27, 1
      %s29 = scalar_select %p28, 0, %s27
      %s30 = sadd.s32 1, %s19
      %s31 = scalar_select %p28, %s30, %s19
      %p32 = scmp.ge.s32.totalorder %s31, 1
      %s33 = scalar_select %p32, 0, %s31
      %s34 = sadd.s32 1, %s18
      %s35 = scalar_select %p32, %s34, %s18
      %p36 = scmp.ge.s32.totalorder %s35, 2
      %s37 = scalar_select %p36, 0, %s35
      %s38 = ssub.s32 %s19, %s33
      %p39 = scmp.eq.s32.totalorder %s38, 0
      %s41 = sadd.s32 %s40, 1
      %s42 = scalar_select %p39, %s40, %s41
      %p45 = pneg %p39
      %p46 = scmp.eq.s32.totalorder %s11, 1
      %p47 = por %p45, %p46
      %p48 = scmp.ne.s32.totalorder %s40, %s43
      %p49 = scmp.eq.s32.totalorder %s11, 0
      %p50 = por %p48, %p49
      %p51 = scmp.ne.s32.totalorder %s40, %s43
      %p52 = scmp.eq.s32.totalorder %s16, 1
      %p53 = por %p51, %p52
      %p54 = scmp.ne.s32.totalorder %s43, %s44
      %p55 = scmp.eq.s32.totalorder %s16, 0
      %p56 = por %p54, %p55
      %p57 = scmp.ne.s32.totalorder %s43, %s44
      %p58 = scmp.eq.s32.totalorder %s17, 1
      %p59 = por %p57, %p58
      %p61 = scmp.ne.s32.totalorder %s44, %s60
      %p62 = scmp.eq.s32.totalorder %s17, 0
      %p63 = por %p61, %p62
      %s64 = ssub.s32 %s18, %s37
      %s65 = ssub.s32 %s20, %s29
      %s66 = sor.u32 %s64, %s65
      %p67 = scmp.eq.s32.totalorder %s66, 0
      %s69 = sadd.s32 %s68, 1
      %s70 = scalar_select %p67, %s68, %s69
      %p73 = pneg %p67
      %p74 = scmp.eq.s32.totalorder %s11, 1
      %p75 = por %p73, %p74
      %p76 = scmp.ne.s32.totalorder %s68, %s71
      %p77 = scmp.eq.s32.totalorder %s11, 0
      %p78 = por %p76, %p77
      %p79 = scmp.ne.s32.totalorder %s68, %s71
      %p80 = scmp.eq.s32.totalorder %s16, 1
      %p81 = por %p79, %p80
      %p82 = scmp.ne.s32.totalorder %s71, %s72
      %p83 = scmp.eq.s32.totalorder %s16, 0
      %p84 = por %p82, %p83
      %p85 = scmp.ne.s32.totalorder %s71, %s72
      %p86 = scmp.eq.s32.totalorder %s17, 1
      %p87 = por %p85, %p86
      %p89 = scmp.ne.s32.totalorder %s72, %s88
      %p90 = scmp.eq.s32.totalorder %s17, 0
      %p91 = por %p89, %p90
      %s92 = ssub.s32 %s18, %s37
      %s93 = ssub.s32 %s19, %s33
      %s94 = sor.u32 %s92, %s93
      %s95 = ssub.s32 %s20, %s29
      %s96 = sor.u32 %s94, %s95
      %p97 = scmp.eq.s32.totalorder %s96, 0
      %s99 = sadd.s32 %s98, 1
      %s100 = scalar_select %p97, %s98, %s99
      %p103 = pneg %p97
      %p104 = scmp.eq.s32.totalorder %s11, 1
      %p105 = por %p103, %p104
      %p106 = scmp.ne.s32.totalorder %s98, %s101
      %p107 = scmp.eq.s32.totalorder %s11, 0
      %p108 = por %p106, %p107
      %p109 = scmp.ne.s32.totalorder %s98, %s101
      %p110 = scmp.eq.s32.totalorder %s16, 1
      %p111 = por %p109, %p110
      %p112 = scmp.ne.s32.totalorder %s101, %s102
      %p113 = scmp.eq.s32.totalorder %s16, 0
      %p114 = por %p112, %p113
      %p115 = scmp.ne.s32.totalorder %s101, %s102
      %p116 = scmp.eq.s32.totalorder %s17, 1
      %p117 = por %p115, %p116
      %p119 = scmp.ne.s32.totalorder %s102, %s118
      %p120 = scmp.eq.s32.totalorder %s17, 0
      %p121 = por %p119, %p120
      %p122 = scmp.le.s32.totalorder 1, %s11
      %p123 = scmp.lt.s32.totalorder %s11, 3
      %p124 = pnand %p122, %p123
      %p125 = pneg %p124
      // Predicated region
      $region9: #{tpu_custom_call.1} parent=5 // pred_check
        _
      $region10: #{tpu_custom_call.1} parent=5 // pred_check_branch
        %127 = sbr.rel (%p124) target = $region12
      $region11: #{tpu_custom_call.1} parent=5 // pred_region
        %s128 = ssub.s32 %s11, 1
        // Predicated region
        $region13: #{tpu_custom_call.1} parent=11 // pred_check
          %p129 = pneg %p56
        $region14: #{tpu_custom_call.1} parent=11 // pred_check_branch
          %131 = sbr.rel (%p129) target = $region16
        $region15: #{tpu_custom_call.1} parent=11 // pred_region
          %p132 = scmp.lt.s32.totalorder %s22, 0
          %s133 = scalar_select %p132, %s22, 0
          %s134 = smul.addr %s133, 8
          %s135 = scalar_lea.vmem %s0, %s134
        $region16: #{tpu_custom_call.1} parent=11 // pred_fallthru
          _
      $region12: #{tpu_custom_call.1} parent=5 // pred_fallthru
        _
      %p136 = scmp.lt.s32.totalorder %s11, 2
      // Predicated region
      $region17: #{tpu_custom_call.1} parent=5 // pred_check
        %p137 = pneg %p136
      $region18: #{tpu_custom_call.1} parent=5 // pred_check_branch
        %139 = sbr.rel (%p137) target = $region20
      $region19: #{tpu_custom_call.1} parent=5 // pred_region
        // Predicated region
        $region21: #{tpu_custom_call.1} parent=19 // pred_check
          %p140 = pneg %p78
        $region22: #{tpu_custom_call.1} parent=19 // pred_check_branch
          %142 = sbr.rel (%p140) target = $region24
        $region23: #{tpu_custom_call.1} parent=19 // pred_region
          %p143 = scmp.lt.s32.totalorder %s18, 1
          %s144 = scalar_select %p143, %s18, 1
          %p145 = scmp.lt.s32.totalorder %s20, 0
          %s146 = scalar_select %p145, %s20, 0
          %s147 = sadd.s32 %s146, %s144
          %s148 = smul.addr %s147, 4
          %s149 = scalar_lea.vmem %s1, %s148
        $region24: #{tpu_custom_call.1} parent=19 // pred_fallthru
          _
      $region20: #{tpu_custom_call.1} parent=5 // pred_fallthru
        _
      %p150 = scmp.le.s32.totalorder 1, %s11
      %p151 = scmp.lt.s32.totalorder %s11, 3
      %p152 = pnand %p150, %p151
      %p153 = pneg %p152
      // Predicated region
      $region25: #{tpu_custom_call.1} parent=5 // pred_check
        _
      $region26: #{tpu_custom_call.1} parent=5 // pred_check_branch
        %155 = sbr.rel (%p152) target = $region28
      $region27: #{tpu_custom_call.1} parent=5 // pred_region
        %s156 = ssub.s32 %s11, 1
        %p157 = scmp.lt.s32.totalorder %s22, 0
        %s158 = scalar_select %p157, %s22, 0
        %s159 = smul.addr %s158, 8
        %s160 = scalar_lea.vmem %s0, %s159
        %p161 = pneg %p56
        %p162 = pneg %p53
        %p163 = scmp.lt.s32.totalorder %s21, 1
        %s164 = scalar_select %p163, %s21, 1
        %p165 = scmp.lt.s32.totalorder %s23, 0
        %s166 = scalar_select %p165, %s23, 0
        %s167 = sadd.s32 %s166, %s164
        %s168 = smul.addr %s167, 4
        %s169 = scalar_lea.vmem %s1, %s168
        %p170 = pneg %p84
        %p171 = pneg %p81
        %p172 = pneg %p114
        %p173 = pneg %p111
        %s174 = sand.u32 %s101, 1
        %s175 = scalar_lea.sflag [#allocation3], %s174
        %s176 = sand.u32 %s101, 1
        %s177 = smul.addr %s176, 8
        %s178 = scalar_lea.vmem [#allocation2], %s177
        %p179 = scmp.lt.s32.totalorder %s22, 0
        %s180 = scalar_select %p179, %s22, 0
        %s181 = smul.addr %s180, 8
        %s182 = scalar_lea.vmem %s0, %s181
        %p183 = scmp.lt.s32.totalorder %s21, 1
        %s184 = scalar_select %p183, %s21, 1
        %p185 = scmp.lt.s32.totalorder %s23, 0
        %s186 = scalar_select %p185, %s23, 0
        %s187 = sadd.s32 %s186, %s184
        %s188 = smul.addr %s187, 4
        %s189 = scalar_lea.vmem %s1, %s188
        %v190 = vld [vmem:[%s182] sm:$0xff]
        %v191 = vld [vmem:[%s189] sm:$0xf]
        %vm192 = vcmask 31744
        %v194 = vsel %vm192, %v190, 0
        %vm196 = vcmask 1043456
        %v198 = vsel %vm196, %v191, 0
        %200 = vmatprep.subr.mxu0 0.0
        %201 = vmatpush1.msra.mxu0 0.0
        %202 = vmatprep.subr.mxu0 0.0
        %203 = vmatpush1.msra.mxu0 0.0
        %204 = vmatprep.subr.mxu0 0.0
        %205 = vmatpush1.msra.mxu0 0.0
        %206 = vmatprep.subr.mxu0 0.0
        %207 = vmatpush1.msra.mxu0 0.0
        %208 = vmatprep.subr.mxu0 0.0
        %209 = vmatpush1.msra.mxu0 0.0
        %210 = vmatprep.subr.mxu0 0.0
        %211 = vmatpush1.msra.mxu0 0.0
        %212 = vmatprep.subr.mxu0 0.0
        %213 = vmatpush1.msra.mxu0 0.0
        %214 = vmatprep.subr.mxu0 0.0
        %215 = vmatpush1.msra.mxu0 0.0
        %216 = vmatprep.subr.mxu0 0.0
        %217 = vmatpush1.msra.mxu0 0.0
        %218 = vmatprep.subr.mxu0 0.0
        %219 = vmatpush1.msra.mxu0 0.0
        %220 = vmatprep.subr.mxu0 0.0
        %221 = vmatpush1.msra.mxu0 0.0
        %222 = vmatprep.subr.mxu0 0.0
        %223 = vmatpush1.msra.mxu0 0.0
        %224 = vmatprep.subr.mxu0 0.0
        %225 = vmatpush1.msra.mxu0 0.0
        %226 = vmatprep.subr.mxu0 0.0
        %227 = vmatpush1.msra.mxu0 0.0
        %228 = vmatprep.subr.mxu0 0.0
        %229 = vmatpush1.msra.mxu0 0.0
        %230 = vmatprep.subr.mxu0 0.0
        %v231 = vand.u32 %v198, 4294901760
        %232 = vmatpush1.msra.mxu0 %v231
        %233 = vmatprep.subr.mxu0 0.0
        %234 = vmatpush2.msra.mxu0 0.0
        %235 = vmatprep.subr.mxu0 0.0
        %236 = vmatpush2.msra.mxu0 0.0
        %237 = vmatprep.subr.mxu0 0.0
        %238 = vmatpush2.msra.mxu0 0.0
        %239 = vmatprep.subr.mxu0 0.0
        %240 = vmatpush2.msra.mxu0 0.0
        %241 = vmatprep.subr.mxu0 0.0
        %242 = vmatpush2.msra.mxu0 0.0
        %243 = vmatprep.subr.mxu0 0.0
        %244 = vmatpush2.msra.mxu0 0.0
        %245 = vmatprep.subr.mxu0 0.0
        %246 = vmatpush2.msra.mxu0 0.0
        %247 = vmatprep.subr.mxu0 0.0
        %248 = vmatpush2.msra.mxu0 0.0
        %249 = vmatprep.subr.mxu0 0.0
        %250 = vmatpush2.msra.mxu0 0.0
        %251 = vmatprep.subr.mxu0 0.0
        %252 = vmatpush2.msra.mxu0 0.0
        %253 = vmatprep.subr.mxu0 0.0
        %254 = vmatpush2.msra.mxu0 0.0
        %255 = vmatprep.subr.mxu0 0.0
        %256 = vmatpush2.msra.mxu0 0.0
        %257 = vmatprep.subr.mxu0 0.0
        %258 = vmatpush2.msra.mxu0 0.0
        %259 = vmatprep.subr.mxu0 0.0
        %260 = vmatpush2.msra.mxu0 0.0
        %261 = vmatprep.subr.mxu0 0.0
        %262 = vmatpush2.msra.mxu0 0.0
        %263 = vmatprep.subr.mxu0 0.0
        %264 = vmatpush2.msra.mxu0 0.0
        %265 = vmatprep.mubr.f32.mxu0 0.0
        %v266 = vand.u32 %v194, 4294901760
        %v267 = vsub.f32 %v194, %v266
        %v268 = vand.u32 %v267, 4294901760
        %v269 = vsub.f32 %v267, %v268
        %v270 = vand.u32 %v269, 4294901760
        %271 = vmatmul.mubr.f32.gmra.mxu0 %v270
        %v272 = vpop.f32.mrf.mxu0
        %v273 = vadd.f32 0.0, %v272
        %v274 = vpop.f32.mrf.mxu0
        %275 = vdwg.mxu0
        %276 = vmatprep.subr.mxu0 0.0
        %277 = vmatpush1.msra.mxu0 0.0
        %278 = vmatprep.subr.mxu0 0.0
        %279 = vmatpush1.msra.mxu0 0.0
        %280 = vmatprep.subr.mxu0 0.0
        %281 = vmatpush1.msra.mxu0 0.0
        %282 = vmatprep.subr.mxu0 0.0
        %283 = vmatpush1.msra.mxu0 0.0
        %284 = vmatprep.subr.mxu0 0.0
        %285 = vmatpush1.msra.mxu0 0.0
        %286 = vmatprep.subr.mxu0 0.0
        %287 = vmatpush1.msra.mxu0 0.0
        %288 = vmatprep.subr.mxu0 0.0
        %289 = vmatpush1.msra.mxu0 0.0
        %290 = vmatprep.subr.mxu0 0.0
        %291 = vmatpush1.msra.mxu0 0.0
        %292 = vmatprep.subr.mxu0 0.0
        %293 = vmatpush1.msra.mxu0 0.0
        %294 = vmatprep.subr.mxu0 0.0
        %295 = vmatpush1.msra.mxu0 0.0
        %296 = vmatprep.subr.mxu0 0.0
        %297 = vmatpush1.msra.mxu0 0.0
        %298 = vmatprep.subr.mxu0 0.0
        %299 = vmatpush1.msra.mxu0 0.0
        %300 = vmatprep.subr.mxu0 0.0
        %301 = vmatpush1.msra.mxu0 0.0
        %302 = vmatprep.subr.mxu0 0.0
        %303 = vmatpush1.msra.mxu0 0.0
        %304 = vmatprep.subr.mxu0 0.0
        %305 = vmatpush1.msra.mxu0 0.0
        %306 = vmatprep.subr.mxu0 0.0
        %v307 = vand.u32 %v198, 4294901760
        %v308 = vsub.f32 %v198, %v307
        %v309 = vand.u32 %v308, 4294901760
        %v310 = vsub.f32 %v308, %v309
        %v311 = vand.u32 %v310, 4294901760
        %312 = vmatpush1.msra.mxu0 %v311
        %313 = vmatprep.subr.mxu0 0.0
        %314 = vmatpush2.msra.mxu0 0.0
        %315 = vmatprep.subr.mxu0 0.0
        %316 = vmatpush2.msra.mxu0 0.0
        %317 = vmatprep.subr.mxu0 0.0
        %318 = vmatpush2.msra.mxu0 0.0
        %319 = vmatprep.subr.mxu0 0.0
        %320 = vmatpush2.msra.mxu0 0.0
        %321 = vmatprep.subr.mxu0 0.0
        %322 = vmatpush2.msra.mxu0 0.0
        %323 = vmatprep.subr.mxu0 0.0
        %324 = vmatpush2.msra.mxu0 0.0
        %325 = vmatprep.subr.mxu0 0.0
        %326 = vmatpush2.msra.mxu0 0.0
        %327 = vmatprep.subr.mxu0 0.0
        %328 = vmatpush2.msra.mxu0 0.0
        %329 = vmatprep.subr.mxu0 0.0
        %330 = vmatpush2.msra.mxu0 0.0
        %331 = vmatprep.subr.mxu0 0.0
        %332 = vmatpush2.msra.mxu0 0.0
        %333 = vmatprep.subr.mxu0 0.0
        %334 = vmatpush2.msra.mxu0 0.0
        %335 = vmatprep.subr.mxu0 0.0
        %336 = vmatpush2.msra.mxu0 0.0
        %337 = vmatprep.subr.mxu0 0.0
        %338 = vmatpush2.msra.mxu0 0.0
        %339 = vmatprep.subr.mxu0 0.0
        %340 = vmatpush2.msra.mxu0 0.0
        %341 = vmatprep.subr.mxu0 0.0
        %342 = vmatpush2.msra.mxu0 0.0
        %343 = vmatprep.subr.mxu0 0.0
        %344 = vmatpush2.msra.mxu0 0.0
        %345 = vmatprep.mubr.f32.mxu0 0.0
        %v346 = vand.u32 %v194, 4294901760
        %347 = vmatmul.mubr.f32.gmra.mxu0 %v346
        %v348 = vpop.f32.mrf.mxu0
        %v349 = vadd.f32 %v273, %v348
        %v350 = vpop.f32.mrf.mxu0
        %351 = vdwg.mxu0
        %352 = vmatprep.subr.mxu0 0.0
        %353 = vmatpush1.msra.mxu0 0.0
        %354 = vmatprep.subr.mxu0 0.0
        %355 = vmatpush1.msra.mxu0 0.0
        %356 = vmatprep.subr.mxu0 0.0
        %357 = vmatpush1.msra.mxu0 0.0
        %358 = vmatprep.subr.mxu0 0.0
        %359 = vmatpush1.msra.mxu0 0.0
        %360 = vmatprep.subr.mxu0 0.0
        %361 = vmatpush1.msra.mxu0 0.0
        %362 = vmatprep.subr.mxu0 0.0
        %363 = vmatpush1.msra.mxu0 0.0
        %364 = vmatprep.subr.mxu0 0.0
        %365 = vmatpush1.msra.mxu0 0.0
        %366 = vmatprep.subr.mxu0 0.0
        %367 = vmatpush1.msra.mxu0 0.0
        %368 = vmatprep.subr.mxu0 0.0
        %369 = vmatpush1.msra.mxu0 0.0
        %370 = vmatprep.subr.mxu0 0.0
        %371 = vmatpush1.msra.mxu0 0.0
        %372 = vmatprep.subr.mxu0 0.0
        %373 = vmatpush1.msra.mxu0 0.0
        %374 = vmatprep.subr.mxu0 0.0
        %375 = vmatpush1.msra.mxu0 0.0
        %376 = vmatprep.subr.mxu0 0.0
        %377 = vmatpush1.msra.mxu0 0.0
        %378 = vmatprep.subr.mxu0 0.0
        %379 = vmatpush1.msra.mxu0 0.0
        %380 = vmatprep.subr.mxu0 0.0
        %381 = vmatpush1.msra.mxu0 0.0
        %382 = vmatprep.subr.mxu0 0.0
        %v383 = vand.u32 %v198, 4294901760
        %v384 = vsub.f32 %v198, %v383
        %385 = vmatpush1.msra.mxu0 %v384
        %386 = vmatprep.subr.mxu0 0.0
        %387 = vmatpush2.msra.mxu0 0.0
        %388 = vmatprep.subr.mxu0 0.0
        %389 = vmatpush2.msra.mxu0 0.0
        %390 = vmatprep.subr.mxu0 0.0
        %391 = vmatpush2.msra.mxu0 0.0
        %392 = vmatprep.subr.mxu0 0.0
        %393 = vmatpush2.msra.mxu0 0.0
        %394 = vmatprep.subr.mxu0 0.0
        %395 = vmatpush2.msra.mxu0 0.0
        %396 = vmatprep.subr.mxu0 0.0
        %397 = vmatpush2.msra.mxu0 0.0
        %398 = vmatprep.subr.mxu0 0.0
        %399 = vmatpush2.msra.mxu0 0.0
        %400 = vmatprep.subr.mxu0 0.0
        %401 = vmatpush2.msra.mxu0 0.0
        %402 = vmatprep.subr.mxu0 0.0
        %403 = vmatpush2.msra.mxu0 0.0
        %404 = vmatprep.subr.mxu0 0.0
        %405 = vmatpush2.msra.mxu0 0.0
        %406 = vmatprep.subr.mxu0 0.0
        %407 = vmatpush2.msra.mxu0 0.0
        %408 = vmatprep.subr.mxu0 0.0
        %409 = vmatpush2.msra.mxu0 0.0
        %410 = vmatprep.subr.mxu0 0.0
        %411 = vmatpush2.msra.mxu0 0.0
        %412 = vmatprep.subr.mxu0 0.0
        %413 = vmatpush2.msra.mxu0 0.0
        %414 = vmatprep.subr.mxu0 0.0
        %415 = vmatpush2.msra.mxu0 0.0
        %416 = vmatprep.subr.mxu0 0.0
        %417 = vmatpush2.msra.mxu0 0.0
        %418 = vmatprep.mubr.f32.mxu0 0.0
        %v419 = vand.u32 %v194, 4294901760
        %v420 = vsub.f32 %v194, %v419
        %421 = vmatmul.mubr.f32.gmra.mxu0 %v420
        %v422 = vpop.f32.mrf.mxu0
        %v423 = vadd.f32 %v349, %v422
        %v424 = vpop.f32.mrf.mxu0
        %425 = vdwg.mxu0
        %426 = vmatprep.subr.mxu0 0.0
        %427 = vmatpush1.msra.mxu0 0.0
        %428 = vmatprep.subr.mxu0 0.0
        %429 = vmatpush1.msra.mxu0 0.0
        %430 = vmatprep.subr.mxu0 0.0
        %431 = vmatpush1.msra.mxu0 0.0
        %432 = vmatprep.subr.mxu0 0.0
        %433 = vmatpush1.msra.mxu0 0.0
        %434 = vmatprep.subr.mxu0 0.0
        %435 = vmatpush1.msra.mxu0 0.0
        %436 = vmatprep.subr.mxu0 0.0
        %437 = vmatpush1.msra.mxu0 0.0
        %438 = vmatprep.subr.mxu0 0.0
        %439 = vmatpush1.msra.mxu0 0.0
        %440 = vmatprep.subr.mxu0 0.0
        %441 = vmatpush1.msra.mxu0 0.0
        %442 = vmatprep.subr.mxu0 0.0
        %443 = vmatpush1.msra.mxu0 0.0
        %444 = vmatprep.subr.mxu0 0.0
        %445 = vmatpush1.msra.mxu0 0.0
        %446 = vmatprep.subr.mxu0 0.0
        %447 = vmatpush1.msra.mxu0 0.0
        %448 = vmatprep.subr.mxu0 0.0
        %449 = vmatpush1.msra.mxu0 0.0
        %450 = vmatprep.subr.mxu0 0.0
        %451 = vmatpush1.msra.mxu0 0.0
        %452 = vmatprep.subr.mxu0 0.0
        %453 = vmatpush1.msra.mxu0 0.0
        %454 = vmatprep.subr.mxu0 0.0
        %455 = vmatpush1.msra.mxu0 0.0
        %456 = vmatprep.subr.mxu0 0.0
        %v457 = vand.u32 %v198, 4294901760
        %458 = vmatpush1.msra.mxu0 %v457
        %459 = vmatprep.subr.mxu0 0.0
        %460 = vmatpush2.msra.mxu0 0.0
        %461 = vmatprep.subr.mxu0 0.0
        %462 = vmatpush2.msra.mxu0 0.0
        %463 = vmatprep.subr.mxu0 0.0
        %464 = vmatpush2.msra.mxu0 0.0
        %465 = vmatprep.subr.mxu0 0.0
        %466 = vmatpush2.msra.mxu0 0.0
        %467 = vmatprep.subr.mxu0 0.0
        %468 = vmatpush2.msra.mxu0 0.0
        %469 = vmatprep.subr.mxu0 0.0
        %470 = vmatpush2.msra.mxu0 0.0
        %471 = vmatprep.subr.mxu0 0.0
        %472 = vmatpush2.msra.mxu0 0.0
        %473 = vmatprep.subr.mxu0 0.0
        %474 = vmatpush2.msra.mxu0 0.0
        %475 = vmatprep.subr.mxu0 0.0
        %476 = vmatpush2.msra.mxu0 0.0
        %477 = vmatprep.subr.mxu0 0.0
        %478 = vmatpush2.msra.mxu0 0.0
        %479 = vmatprep.subr.mxu0 0.0
        %480 = vmatpush2.msra.mxu0 0.0
        %481 = vmatprep.subr.mxu0 0.0
        %482 = vmatpush2.msra.mxu0 0.0
        %483 = vmatprep.subr.mxu0 0.0
        %484 = vmatpush2.msra.mxu0 0.0
        %485 = vmatprep.subr.mxu0 0.0
        %486 = vmatpush2.msra.mxu0 0.0
        %487 = vmatprep.subr.mxu0 0.0
        %488 = vmatpush2.msra.mxu0 0.0
        %489 = vmatprep.subr.mxu0 0.0
        %490 = vmatpush2.msra.mxu0 0.0
        %491 = vmatprep.mubr.f32.mxu0 0.0
        %v492 = vand.u32 %v194, 4294901760
        %v493 = vsub.f32 %v194, %v492
        %v494 = vand.u32 %v493, 4294901760
        %495 = vmatmul.mubr.f32.gmra.mxu0 %v494
        %v496 = vpop.f32.mrf.mxu0
        %v497 = vadd.f32 %v423, %v496
        %v498 = vpop.f32.mrf.mxu0
        %499 = vdwg.mxu0
        %500 = vmatprep.subr.mxu0 0.0
        %501 = vmatpush1.msra.mxu0 0.0
        %502 = vmatprep.subr.mxu0 0.0
        %503 = vmatpush1.msra.mxu0 0.0
        %504 = vmatprep.subr.mxu0 0.0
        %505 = vmatpush1.msra.mxu0 0.0
        %506 = vmatprep.subr.mxu0 0.0
        %507 = vmatpush1.msra.mxu0 0.0
        %508 = vmatprep.subr.mxu0 0.0
        %509 = vmatpush1.msra.mxu0 0.0
        %510 = vmatprep.subr.mxu0 0.0
        %511 = vmatpush1.msra.mxu0 0.0
        %512 = vmatprep.subr.mxu0 0.0
        %513 = vmatpush1.msra.mxu0 0.0
        %514 = vmatprep.subr.mxu0 0.0
        %515 = vmatpush1.msra.mxu0 0.0
        %516 = vmatprep.subr.mxu0 0.0
        %517 = vmatpush1.msra.mxu0 0.0
        %518 = vmatprep.subr.mxu0 0.0
        %519 = vmatpush1.msra.mxu0 0.0
        %520 = vmatprep.subr.mxu0 0.0
        %521 = vmatpush1.msra.mxu0 0.0
        %522 = vmatprep.subr.mxu0 0.0
        %523 = vmatpush1.msra.mxu0 0.0
        %524 = vmatprep.subr.mxu0 0.0
        %525 = vmatpush1.msra.mxu0 0.0
        %526 = vmatprep.subr.mxu0 0.0
        %527 = vmatpush1.msra.mxu0 0.0
        %528 = vmatprep.subr.mxu0 0.0
        %529 = vmatpush1.msra.mxu0 0.0
        %530 = vmatprep.subr.mxu0 0.0
        %v531 = vand.u32 %v198, 4294901760
        %v532 = vsub.f32 %v198, %v531
        %v533 = vand.u32 %v532, 4294901760
        %534 = vmatpush1.msra.mxu0 %v533
        %535 = vmatprep.subr.mxu0 0.0
        %536 = vmatpush2.msra.mxu0 0.0
        %537 = vmatprep.subr.mxu0 0.0
        %538 = vmatpush2.msra.mxu0 0.0
        %539 = vmatprep.subr.mxu0 0.0
        %540 = vmatpush2.msra.mxu0 0.0
        %541 = vmatprep.subr.mxu0 0.0
        %542 = vmatpush2.msra.mxu0 0.0
        %543 = vmatprep.subr.mxu0 0.0
        %544 = vmatpush2.msra.mxu0 0.0
        %545 = vmatprep.subr.mxu0 0.0
        %546 = vmatpush2.msra.mxu0 0.0
        %547 = vmatprep.subr.mxu0 0.0
        %548 = vmatpush2.msra.mxu0 0.0
        %549 = vmatprep.subr.mxu0 0.0
        %550 = vmatpush2.msra.mxu0 0.0
        %551 = vmatprep.subr.mxu0 0.0
        %552 = vmatpush2.msra.mxu0 0.0
        %553 = vmatprep.subr.mxu0 0.0
        %554 = vmatpush2.msra.mxu0 0.0
        %555 = vmatprep.subr.mxu0 0.0
        %556 = vmatpush2.msra.mxu0 0.0
        %557 = vmatprep.subr.mxu0 0.0
        %558 = vmatpush2.msra.mxu0 0.0
        %559 = vmatprep.subr.mxu0 0.0
        %560 = vmatpush2.msra.mxu0 0.0
        %561 = vmatprep.subr.mxu0 0.0
        %562 = vmatpush2.msra.mxu0 0.0
        %563 = vmatprep.subr.mxu0 0.0
        %564 = vmatpush2.msra.mxu0 0.0
        %565 = vmatprep.subr.mxu0 0.0
        %566 = vmatpush2.msra.mxu0 0.0
        %567 = vmatprep.mubr.f32.mxu0 0.0
        %v568 = vand.u32 %v194, 4294901760
        %569 = vmatmul.mubr.f32.gmra.mxu0 %v568
        %v570 = vpop.f32.mrf.mxu0
        %v571 = vadd.f32 %v497, %v570
        %v572 = vpop.f32.mrf.mxu0
        %573 = vdwg.mxu0
        %574 = vmatprep.subr.mxu0 0.0
        %575 = vmatpush1.msra.mxu0 0.0
        %576 = vmatprep.subr.mxu0 0.0
        %577 = vmatpush1.msra.mxu0 0.0
        %578 = vmatprep.subr.mxu0 0.0
        %579 = vmatpush1.msra.mxu0 0.0
        %580 = vmatprep.subr.mxu0 0.0
        %581 = vmatpush1.msra.mxu0 0.0
        %582 = vmatprep.subr.mxu0 0.0
        %583 = vmatpush1.msra.mxu0 0.0
        %584 = vmatprep.subr.mxu0 0.0
        %585 = vmatpush1.msra.mxu0 0.0
        %586 = vmatprep.subr.mxu0 0.0
        %587 = vmatpush1.msra.mxu0 0.0
        %588 = vmatprep.subr.mxu0 0.0
        %589 = vmatpush1.msra.mxu0 0.0
        %590 = vmatprep.subr.mxu0 0.0
        %591 = vmatpush1.msra.mxu0 0.0
        %592 = vmatprep.subr.mxu0 0.0
        %593 = vmatpush1.msra.mxu0 0.0
        %594 = vmatprep.subr.mxu0 0.0
        %595 = vmatpush1.msra.mxu0 0.0
        %596 = vmatprep.subr.mxu0 0.0
        %597 = vmatpush1.msra.mxu0 0.0
        %598 = vmatprep.subr.mxu0 0.0
        %599 = vmatpush1.msra.mxu0 0.0
        %600 = vmatprep.subr.mxu0 0.0
        %601 = vmatpush1.msra.mxu0 0.0
        %602 = vmatprep.subr.mxu0 0.0
        %603 = vmatpush1.msra.mxu0 0.0
        %604 = vmatprep.subr.mxu0 0.0
        %v605 = vand.u32 %v198, 4294901760
        %606 = vmatpush1.msra.mxu0 %v605
        %607 = vmatprep.subr.mxu0 0.0
        %608 = vmatpush2.msra.mxu0 0.0
        %609 = vmatprep.subr.mxu0 0.0
        %610 = vmatpush2.msra.mxu0 0.0
        %611 = vmatprep.subr.mxu0 0.0
        %612 = vmatpush2.msra.mxu0 0.0
        %613 = vmatprep.subr.mxu0 0.0
        %614 = vmatpush2.msra.mxu0 0.0
        %615 = vmatprep.subr.mxu0 0.0
        %616 = vmatpush2.msra.mxu0 0.0
        %617 = vmatprep.subr.mxu0 0.0
        %618 = vmatpush2.msra.mxu0 0.0
        %619 = vmatprep.subr.mxu0 0.0
        %620 = vmatpush2.msra.mxu0 0.0
        %621 = vmatprep.subr.mxu0 0.0
        %622 = vmatpush2.msra.mxu0 0.0
        %623 = vmatprep.subr.mxu0 0.0
        %624 = vmatpush2.msra.mxu0 0.0
        %625 = vmatprep.subr.mxu0 0.0
        %626 = vmatpush2.msra.mxu0 0.0
        %627 = vmatprep.subr.mxu0 0.0
        %628 = vmatpush2.msra.mxu0 0.0
        %629 = vmatprep.subr.mxu0 0.0
        %630 = vmatpush2.msra.mxu0 0.0
        %631 = vmatprep.subr.mxu0 0.0
        %632 = vmatpush2.msra.mxu0 0.0
        %633 = vmatprep.subr.mxu0 0.0
        %634 = vmatpush2.msra.mxu0 0.0
        %635 = vmatprep.subr.mxu0 0.0
        %636 = vmatpush2.msra.mxu0 0.0
        %637 = vmatprep.subr.mxu0 0.0
        %638 = vmatpush2.msra.mxu0 0.0
        %639 = vmatprep.mubr.f32.mxu0 0.0
        %v640 = vand.u32 %v194, 4294901760
        %641 = vmatmul.mubr.f32.gmra.mxu0 %v640
        %v642 = vpop.f32.mrf.mxu0
        %v643 = vadd.f32 %v571, %v642
        %v644 = vpop.f32.mrf.mxu0
        %645 = vdwg.mxu0
        %vm646 = vcmask 392192
        %647 = vst.msk [vmem:[%s178] sm:$0xff] %vm646, %v643
        %s648 = sand.u32 %s101, 1
        %s649 = scalar_lea.sflag [#allocation3], %s648
        %s650 = sand.u32 %s101, 1
        %s651 = smul.addr %s650, 8
        %s652 = scalar_lea.vmem [#allocation2], %s651
        // Predicated region
        $region29: #{tpu_custom_call.1} parent=27 // pred_check
          %p653 = pneg %p111
        $region30: #{tpu_custom_call.1} parent=27 // pred_check_branch
          %655 = sbr.rel (%p653) target = $region32
        $region31: #{tpu_custom_call.1} parent=27 // pred_region
          %s657 = ssub.s32 128, 128
          %658 = vsyncadd %s649, %s657
          %s659 = sadd.s32 %s23, %s22
          %s660 = sadd.s32 %s659, %s21
          %s661 = smul.addr %s660, 128
          %s662 = scalar_lea.hbm %s2, %s661
          %s664 = sshll.u32 %s652, 4
          %s665 = int_to_ptr.vmem [resolvable:$true] %s664
          %667 = dma.vmem_to_hbm [thread:$0]  %s665, 128, %s662, %s649
        $region32: #{tpu_custom_call.1} parent=27 // pred_fallthru
          _
      $region28: #{tpu_custom_call.1} parent=5 // pred_fallthru
        _
      %p668 = scmp.le.s32.totalorder 2, %s11
      // Predicated region
      $region33: #{tpu_custom_call.1} parent=5 // pred_check
        %p669 = pneg %p668
      $region34: #{tpu_custom_call.1} parent=5 // pred_check_branch
        %671 = sbr.rel (%p669) target = $region36
      $region35: #{tpu_custom_call.1} parent=5 // pred_region
        %s672 = ssub.s32 %s11, 2
        // Predicated region
        $region37: #{tpu_custom_call.1} parent=35 // pred_check
          %p673 = pneg %p117
        $region38: #{tpu_custom_call.1} parent=35 // pred_check_branch
          %675 = sbr.rel (%p673) target = $region40
        $region39: #{tpu_custom_call.1} parent=35 // pred_region
          %s676 = sand.u32 %s102, 1
          %s677 = scalar_lea.sflag [#allocation3], %s676
          %s678 = sand.u32 %s102, 1
          %s679 = smul.addr %s678, 8
          %s680 = scalar_lea.vmem [#allocation2], %s679
          %681 = dma.done %s677, 128
        $region40: #{tpu_custom_call.1} parent=35 // pred_fallthru
          _
      $region36: #{tpu_custom_call.1} parent=5 // pred_fallthru
        _
    $region6: #{tpu_custom_call.1} parent=1 // loop_footer
      %s15 = sadd.s32 1, %s11
    $region7: #{tpu_custom_call.1} parent=1 // loop_footer_branch
      %10 = sbr.rel target = $region3
    $region8: #{tpu_custom_call.1} parent=1 // loop_exit
      _
    %682 = vsyncpa [#allocation3], 1
    %s683 = scalar_lea.sflag [#allocation3], 1
    %684 = vsyncpa %s683, 1

</llo_original>
